<compile_context>
chip_gen: v7x
topology: tpu7x:2x2x1
jax: 0.10.0
libtpu: 0.0.40
codegen_flags: <defaults>
</compile_context>

<pallas_src>
import functools

import jax
import jax.numpy as jnp
from jax.experimental import pallas as pl
from jax.experimental.pallas import tpu as pltpu


N_LAYER = 25  # fixed by the module (self.n_layer = 25)


# ------------------------------------------------------------------
# Pallas kernel: streamed weighted layer-sum (hot path of _SE_merge)
#   out[b, t, :] = sum_l attn[b, l] * x[b, l, t, :]
# ------------------------------------------------------------------
def _weighted_layer_sum_kernel(attn_sref, x_ref, o_ref, *, sub):
    # attn_sref: (B, L) f32 in SMEM (scalar-prefetched SE attention weights)
    # x_ref    : (1, L, tT, D) stacked hidden-state tile (f32 or bf16)
    # o_ref    : (1, tT, D)    output tile
    b = pl.program_id(0)
    n_layer = x_ref.shape[1]
    t_tile = x_ref.shape[2]

    # Hoist the per-layer scalar weights (SMEM reads) out of the hot loops.
    w = [attn_sref[b, l] for l in range(n_layer)]

    # Register accumulation: for each static sub-chunk of `sub` sublanes,
    # unroll the 25-layer FMA chain on a value (<= sub*D/… vregs live) and
    # write the output slab exactly once.  No VMEM accumulator RMW traffic.
    for r0 in range(0, t_tile, sub):
        acc = w[0] * x_ref[0, 0, r0:r0 + sub, :].astype(jnp.float32)
        for l in range(1, n_layer):
            acc = acc + w[l] * x_ref[0, l, r0:r0 + sub, :].astype(jnp.float32)
        o_ref[0, r0:r0 + sub, :] = acc.astype(o_ref.dtype)


# ------------------------------------------------------------------
# Sizing helpers
# ------------------------------------------------------------------
def _round_up(x, m):
    return ((x + m - 1) // m) * m


def _physical_vmem_bytes():
    """Per-TensorCore VMEM; assume v7x (64 MiB) if the query is unavailable."""
    try:
        info = pltpu.get_tpu_info()
        v = getattr(info, "vmem_capacity_bytes", None)
        if v:
            return int(v)
    except Exception:
        pass
    return 64 << 20


def _block_bytes(L, t_tile, D, in_dtype, out_dtype):
    """Double-buffered input + output block footprint for one grid step."""
    x = L * t_tile * D * jnp.dtype(in_dtype).itemsize
    o = t_tile * D * jnp.dtype(out_dtype).itemsize
    return 2 * x + 2 * o


def _pick_t_tile(T, sub, target):
    """Tile of sublane-aligned rows, <= target; divisor of T preferred."""
    target = max(sub, (target // sub) * sub)
    if T <= target:
        return _round_up(T, sub)
    for tt in range(target, sub - 1, -sub):   # multiples of `sub` only
        if T % tt == 0:
            return tt
    return target  # no aligned divisor: pad path handles the tail


# ------------------------------------------------------------------
# Wrapper
# ------------------------------------------------------------------
def weighted_layer_sum(stacked, attn, *, t_tile=None, out_dtype=jnp.float32):
    """out[b] = sum_l attn[b, l] * stacked[b, l];  stacked: (B, L, T, D)."""
    B, L, T, D = stacked.shape
    attn = attn.astype(jnp.float32)
    assert attn.shape == (B, L), (attn.shape, (B, L))

    # dtype-aware sublane packing: bf16 packs 16 rows per vreg, f32 packs 8.
    sub = 16 if jnp.dtype(stacked.dtype) == jnp.bfloat16 else 8

    phys_vmem = _physical_vmem_bytes()
    # Leave headroom below physical VMEM (critical on v7x: 64 MiB total).
    vmem_cap = min(int(phys_vmem * 0.72), 96 << 20)
    # Bigger tiles on 128-MiB chips (v5e/v6e); 128-row tiles on v7x.
    target = 256 if phys_vmem >= (100 << 20) else 128

    if t_tile is None:
        t_tile = _pick_t_tile(T, sub, target)
    assert t_tile % sub == 0, (
        f"t_tile={t_tile} must be a multiple of the sublane pack {sub} "
        f"for dtype {stacked.dtype}")

    # Shrink the tile until the double-buffered footprint fits under the cap.
    while (_block_bytes(L, t_tile, D, stacked.dtype, out_dtype) + (2 << 20)
           > vmem_cap and t_tile > sub):
        t_tile = max(sub, ((t_tile // 2) // sub) * sub)

    # Never fall back to whole-T blocks: pad T up to a tile multiple and slice
    # the tail off afterwards (padded rows are zeros; they never reach output).
    T_pad = pl.cdiv(T, t_tile) * t_tile
    x = stacked
    if T_pad != T:
        x = jnp.pad(stacked, ((0, 0), (0, 0), (0, T_pad - T), (0, 0)))
    n_t = T_pad // t_tile

    footprint = _block_bytes(L, t_tile, D, x.dtype, out_dtype)
    vmem_limit = int(min(max(footprint + (2 << 20), 16 << 20), vmem_cap))

    grid_spec = pltpu.PrefetchScalarGridSpec(
        num_scalar_prefetch=1,
        grid=(B, n_t),
        in_specs=[
            pl.BlockSpec((1, L, t_tile, D),
                         lambda b, t, attn_ref: (b, 0, t, 0)),
        ],
        out_specs=pl.BlockSpec((1, t_tile, D),
                               lambda b, t, attn_ref: (b, t, 0)),
    )
    out = pl.pallas_call(
        functools.partial(_weighted_layer_sum_kernel, sub=sub),
        out_shape=jax.ShapeDtypeStruct((B, T_pad, D), out_dtype),
        grid_spec=grid_spec,
        compiler_params=pltpu.CompilerParams(
            dimension_semantics=("parallel", "parallel"),
            vmem_limit_bytes=vmem_limit,
        ),
    )(attn, x)
    if T_pad != T:
        out = out[:, :T, :]
    return out


# ------------------------------------------------------------------
# SE attention weights (tiny; plain JAX, outside the hot loop)
# ------------------------------------------------------------------
def se_attention_from_means(layer_means, w1_t, w2_t):
    """Linear(25->8, no bias) + ReLU + Linear(8->25, no bias) + Sigmoid."""
    y = layer_means.astype(jnp.float32)            # (B, L)
    h = jax.nn.relu(y @ w1_t.T)                    # (B, H)
    return jax.nn.sigmoid(h @ w2_t.T)              # (B, L)


def sea_merge(stacked, w1_t, w2_t, *, layer_means=None, t_tile=None,
              out_dtype=jnp.float32):
    """Full _SE_merge.  Pass `layer_means` (computed when `stacked` was
    produced) to avoid a second full HBM pass over the stacked tensor."""
    if layer_means is None:
        # Fallback path: one extra read of `stacked`.  Explicit accumulation
        # dtype so XLA never materializes a full f32 copy of a bf16 tensor.
        layer_means = jnp.mean(stacked, axis=(2, 3), dtype=jnp.float32)
    attn = se_attention_from_means(layer_means, w1_t, w2_t)
    return weighted_layer_sum(stacked, attn, t_tile=t_tile, out_dtype=out_dtype)


# ------------------------------------------------------------------
# Pure-JAX references (mirror torch _SE_merge) for validation
# ------------------------------------------------------------------
def weighted_layer_sum_ref(stacked, attn):
    s = stacked.astype(jnp.float32)
    return jnp.sum(s * attn.astype(jnp.float32)[:, :, None, None], axis=1)


def sea_merge_ref(stacked, w1_t, w2_t):
    s = stacked.astype(jnp.float32)
    y = jnp.mean(s, axis=(2, 3))                      # AdaptiveAvgPool2d(1)
    h = jax.nn.relu(y @ w1_t.T)
    a = jax.nn.sigmoid(h @ w2_t.T)
    return jnp.sum(s * a[:, :, None, None], axis=1)   # (B, T, D)


# ------------------------------------------------------------------
# Deterministic stand-in for the WavLM backbone (plain-JAX glue)
# ------------------------------------------------------------------
def make_params(key, n_layer, frame_len, out_dim):
    k1, k2, k3 = jax.random.split(key, 3)
    h = max(1, n_layer // 3)
    return {
        # Stand-in backbone: per-layer projection of framed waveform.
        "proj": 0.1 * jax.random.normal(k1, (n_layer, frame_len, out_dim),
                                        dtype=jnp.float32),
        # fc_att_merge weights (PyTorch Linear weight layouts: (out, in)).
        "w1_t": 0.3 * jax.random.normal(k2, (h, n_layer), dtype=jnp.float32),
        "w2_t": 0.3 * jax.random.normal(k3, (n_layer, h), dtype=jnp.float32),
    }


def backbone_stub(wave, params):
    """wave: (B, num_samples) -> list of n_layer hidden states, each (B, T, D)."""
    n_layer, frame_len, _ = params["proj"].shape
    B, n_samp = wave.shape
    T = n_samp // frame_len
    frames = wave[:, : T * frame_len].reshape(B, T, frame_len)
    return [jnp.tanh(frames @ params["proj"][l]) for l in range(n_layer)]


def ssl_model_forward(input_data, params, *, feature_dtype=jnp.bfloat16,
                      t_tile=None, out_dtype=jnp.float32):
    # forward(): 3-D waveform input keeps only channel 0
    if input_data.ndim == 3:
        input_tmp = input_data[:, :, 0]
    else:
        input_tmp = input_data
    hidden_states = backbone_stub(input_tmp, params)          # list of (B, T, D)
    # Per-layer global means computed at PRODUCTION time (f32 accumulate) so
    # the stacked hidden states are streamed from HBM only once — by the
    # Pallas weighted-layer-sum kernel.
    layer_means = jnp.stack(
        [jnp.mean(h, axis=(1, 2), dtype=jnp.float32) for h in hidden_states],
        axis=1)                                                # (B, L)
    stacked = jnp.stack(hidden_states, axis=1).astype(feature_dtype)  # (B,L,T,D)
    return sea_merge(stacked, params["w1_t"], params["w2_t"],
                     layer_means=layer_means, t_tile=t_tile,
                     out_dtype=out_dtype)


# ------------------------------------------------------------------
if __name__ == "__main__":
    B = 2
    FRAME_LEN = 20
    T = 32
    D = 128          # lane-dense stand-in for out_dim=1024 (multiple of 128)
    NUM_SAMPLES = T * FRAME_LEN
    T_TILE = 16      # exercises the (batch, T-tile) grid even at toy sizes

    key = jax.random.PRNGKey(0)
    k_in, k_par = jax.random.split(key)
    input_data = jax.random.normal(k_in, (B, NUM_SAMPLES), dtype=jnp.float32)
    params = make_params(k_par, N_LAYER, FRAME_LEN, D)

    hidden = backbone_stub(input_data, params)
    stacked_f32 = jnp.stack(hidden, axis=1)                    # (B, L, T, D) f32
    layer_means = jnp.mean(stacked_f32, axis=(2, 3), dtype=jnp.float32)
    attn = se_attention_from_means(layer_means, params["w1_t"], params["w2_t"])

    # --- default path: bf16 streaming, f32 accumulate, single HBM pass ---
    out = ssl_model_forward(input_data, params, t_tile=T_TILE)
    out = jax.block_until_ready(out)
    assert out.shape == (B, T, D) and out.dtype == jnp.float32
    ref_bf16 = weighted_layer_sum_ref(stacked_f32.astype(jnp.bfloat16), attn)
    assert jnp.allclose(out, ref_bf16, atol=2e-4, rtol=2e-4)

    # --- f32 streaming path matches the torch-f32 reference ---
    out_f32 = ssl_model_forward(input_data, params,
                                feature_dtype=jnp.float32, t_tile=T_TILE)
    out_f32 = jax.block_until_ready(out_f32)
    ref_f32 = sea_merge_ref(stacked_f32, params["w1_t"], params["w2_t"])
    assert jnp.allclose(out_f32, ref_f32, atol=2e-4, rtol=2e-4)

    # --- T not divisible by the tile exercises the pad/slice tail path ---
    T_odd = 20
    stacked_odd = stacked_f32[:, :, :T_odd, :]
    means_odd = jnp.mean(stacked_odd, axis=(2, 3), dtype=jnp.float32)
    out_odd = sea_merge(stacked_odd, params["w1_t"], params["w2_t"],
                        layer_means=means_odd)
    out_odd = jax.block_until_ready(out_odd)
    ref_odd = sea_merge_ref(stacked_odd, params["w1_t"], params["w2_t"])
    assert out_odd.shape == (B, T_odd, D)
    assert jnp.allclose(out_odd, ref_odd, atol=2e-4, rtol=2e-4)

    print("KERNEL_OK")
</pallas_src>

<mosaic_0001>
module attributes {stable_mosaic.version = 11 : i64} {
  func.func @_weighted_layer_sum_kernel(%arg0: i32, %arg1: i32, %arg2: memref<2x25xf32, #tpu.memory_space<smem>>, %arg3: memref<1x25x16x128xbf16, #tpu.memory_space<vmem>>, %arg4: memref<1x16x128xf32, #tpu.memory_space<vmem>>) attributes {dimension_semantics = [#tpu.dimension_semantics<parallel>, #tpu.dimension_semantics<parallel>], iteration_bounds = array<i64: 2, 2>, scalar_prefetch = 1 : i64, scratch_operands = 0 : i64, tpu.core_type = #tpu.core_type<tc>, window_params = [{transform_indices = @transform_0, window_bounds = array<i64: 1, 25, 16, 128>}, {transform_indices = @transform_1, window_bounds = array<i64: 1, 16, 128>}]} {
    %0 = arith.index_cast %arg0 : i32 to index
    %c0 = arith.constant 0 : index
    %1 = memref.load %arg2[%0, %c0] : memref<2x25xf32, #tpu.memory_space<smem>>
    %2 = arith.index_cast %arg0 : i32 to index
    %c1 = arith.constant 1 : index
    %3 = memref.load %arg2[%2, %c1] : memref<2x25xf32, #tpu.memory_space<smem>>
    %4 = arith.index_cast %arg0 : i32 to index
    %c2 = arith.constant 2 : index
    %5 = memref.load %arg2[%4, %c2] : memref<2x25xf32, #tpu.memory_space<smem>>
    %6 = arith.index_cast %arg0 : i32 to index
    %c3 = arith.constant 3 : index
    %7 = memref.load %arg2[%6, %c3] : memref<2x25xf32, #tpu.memory_space<smem>>
    %8 = arith.index_cast %arg0 : i32 to index
    %c4 = arith.constant 4 : index
    %9 = memref.load %arg2[%8, %c4] : memref<2x25xf32, #tpu.memory_space<smem>>
    %10 = arith.index_cast %arg0 : i32 to index
    %c5 = arith.constant 5 : index
    %11 = memref.load %arg2[%10, %c5] : memref<2x25xf32, #tpu.memory_space<smem>>
    %12 = arith.index_cast %arg0 : i32 to index
    %c6 = arith.constant 6 : index
    %13 = memref.load %arg2[%12, %c6] : memref<2x25xf32, #tpu.memory_space<smem>>
    %14 = arith.index_cast %arg0 : i32 to index
    %c7 = arith.constant 7 : index
    %15 = memref.load %arg2[%14, %c7] : memref<2x25xf32, #tpu.memory_space<smem>>
    %16 = arith.index_cast %arg0 : i32 to index
    %c8 = arith.constant 8 : index
    %17 = memref.load %arg2[%16, %c8] : memref<2x25xf32, #tpu.memory_space<smem>>
    %18 = arith.index_cast %arg0 : i32 to index
    %c9 = arith.constant 9 : index
    %19 = memref.load %arg2[%18, %c9] : memref<2x25xf32, #tpu.memory_space<smem>>
    %20 = arith.index_cast %arg0 : i32 to index
    %c10 = arith.constant 10 : index
    %21 = memref.load %arg2[%20, %c10] : memref<2x25xf32, #tpu.memory_space<smem>>
    %22 = arith.index_cast %arg0 : i32 to index
    %c11 = arith.constant 11 : index
    %23 = memref.load %arg2[%22, %c11] : memref<2x25xf32, #tpu.memory_space<smem>>
    %24 = arith.index_cast %arg0 : i32 to index
    %c12 = arith.constant 12 : index
    %25 = memref.load %arg2[%24, %c12] : memref<2x25xf32, #tpu.memory_space<smem>>
    %26 = arith.index_cast %arg0 : i32 to index
    %c13 = arith.constant 13 : index
    %27 = memref.load %arg2[%26, %c13] : memref<2x25xf32, #tpu.memory_space<smem>>
    %28 = arith.index_cast %arg0 : i32 to index
    %c14 = arith.constant 14 : index
    %29 = memref.load %arg2[%28, %c14] : memref<2x25xf32, #tpu.memory_space<smem>>
    %30 = arith.index_cast %arg0 : i32 to index
    %c15 = arith.constant 15 : index
    %31 = memref.load %arg2[%30, %c15] : memref<2x25xf32, #tpu.memory_space<smem>>
    %32 = arith.index_cast %arg0 : i32 to index
    %c16 = arith.constant 16 : index
    %33 = memref.load %arg2[%32, %c16] : memref<2x25xf32, #tpu.memory_space<smem>>
    %34 = arith.index_cast %arg0 : i32 to index
    %c17 = arith.constant 17 : index
    %35 = memref.load %arg2[%34, %c17] : memref<2x25xf32, #tpu.memory_space<smem>>
    %36 = arith.index_cast %arg0 : i32 to index
    %c18 = arith.constant 18 : index
    %37 = memref.load %arg2[%36, %c18] : memref<2x25xf32, #tpu.memory_space<smem>>
    %38 = arith.index_cast %arg0 : i32 to index
    %c19 = arith.constant 19 : index
    %39 = memref.load %arg2[%38, %c19] : memref<2x25xf32, #tpu.memory_space<smem>>
    %40 = arith.index_cast %arg0 : i32 to index
    %c20 = arith.constant 20 : index
    %41 = memref.load %arg2[%40, %c20] : memref<2x25xf32, #tpu.memory_space<smem>>
    %42 = arith.index_cast %arg0 : i32 to index
    %c21 = arith.constant 21 : index
    %43 = memref.load %arg2[%42, %c21] : memref<2x25xf32, #tpu.memory_space<smem>>
    %44 = arith.index_cast %arg0 : i32 to index
    %c22 = arith.constant 22 : index
    %45 = memref.load %arg2[%44, %c22] : memref<2x25xf32, #tpu.memory_space<smem>>
    %46 = arith.index_cast %arg0 : i32 to index
    %c23 = arith.constant 23 : index
    %47 = memref.load %arg2[%46, %c23] : memref<2x25xf32, #tpu.memory_space<smem>>
    %48 = arith.index_cast %arg0 : i32 to index
    %c24 = arith.constant 24 : index
    %49 = memref.load %arg2[%48, %c24] : memref<2x25xf32, #tpu.memory_space<smem>>
    %c0_0 = arith.constant 0 : index
    %c0_1 = arith.constant 0 : index
    %c0_2 = arith.constant 0 : index
    %c0_3 = arith.constant 0 : index
    %50 = vector.load %arg3[%c0_0, %c0_1, %c0_2, %c0_3] : memref<1x25x16x128xbf16, #tpu.memory_space<vmem>>, vector<1x1x16x128xbf16>
    %51 = vector.shape_cast %50 : vector<1x1x16x128xbf16> to vector<16x128xbf16>
    %52 = arith.extf %51 : vector<16x128xbf16> to vector<16x128xf32>
    %53 = vector.broadcast %1 : f32 to vector<16x128xf32>
    %54 = arith.mulf %53, %52 : vector<16x128xf32>
    %c0_4 = arith.constant 0 : index
    %c1_5 = arith.constant 1 : index
    %c0_6 = arith.constant 0 : index
    %c0_7 = arith.constant 0 : index
    %55 = vector.load %arg3[%c0_4, %c1_5, %c0_6, %c0_7] : memref<1x25x16x128xbf16, #tpu.memory_space<vmem>>, vector<1x1x16x128xbf16>
    %56 = vector.shape_cast %55 : vector<1x1x16x128xbf16> to vector<16x128xbf16>
    %57 = arith.extf %56 : vector<16x128xbf16> to vector<16x128xf32>
    %58 = vector.broadcast %3 : f32 to vector<16x128xf32>
    %59 = arith.mulf %58, %57 : vector<16x128xf32>
    %60 = arith.addf %54, %59 : vector<16x128xf32>
    %c0_8 = arith.constant 0 : index
    %c2_9 = arith.constant 2 : index
    %c0_10 = arith.constant 0 : index
    %c0_11 = arith.constant 0 : index
    %61 = vector.load %arg3[%c0_8, %c2_9, %c0_10, %c0_11] : memref<1x25x16x128xbf16, #tpu.memory_space<vmem>>, vector<1x1x16x128xbf16>
    %62 = vector.shape_cast %61 : vector<1x1x16x128xbf16> to vector<16x128xbf16>
    %63 = arith.extf %62 : vector<16x128xbf16> to vector<16x128xf32>
    %64 = vector.broadcast %5 : f32 to vector<16x128xf32>
    %65 = arith.mulf %64, %63 : vector<16x128xf32>
    %66 = arith.addf %60, %65 : vector<16x128xf32>
    %c0_12 = arith.constant 0 : index
    %c3_13 = arith.constant 3 : index
    %c0_14 = arith.constant 0 : index
    %c0_15 = arith.constant 0 : index
    %67 = vector.load %arg3[%c0_12, %c3_13, %c0_14, %c0_15] : memref<1x25x16x128xbf16, #tpu.memory_space<vmem>>, vector<1x1x16x128xbf16>
    %68 = vector.shape_cast %67 : vector<1x1x16x128xbf16> to vector<16x128xbf16>
    %69 = arith.extf %68 : vector<16x128xbf16> to vector<16x128xf32>
    %70 = vector.broadcast %7 : f32 to vector<16x128xf32>
    %71 = arith.mulf %70, %69 : vector<16x128xf32>
    %72 = arith.addf %66, %71 : vector<16x128xf32>
    %c0_16 = arith.constant 0 : index
    %c4_17 = arith.constant 4 : index
    %c0_18 = arith.constant 0 : index
    %c0_19 = arith.constant 0 : index
    %73 = vector.load %arg3[%c0_16, %c4_17, %c0_18, %c0_19] : memref<1x25x16x128xbf16, #tpu.memory_space<vmem>>, vector<1x1x16x128xbf16>
    %74 = vector.shape_cast %73 : vector<1x1x16x128xbf16> to vector<16x128xbf16>
    %75 = arith.extf %74 : vector<16x128xbf16> to vector<16x128xf32>
    %76 = vector.broadcast %9 : f32 to vector<16x128xf32>
    %77 = arith.mulf %76, %75 : vector<16x128xf32>
    %78 = arith.addf %72, %77 : vector<16x128xf32>
    %c0_20 = arith.constant 0 : index
    %c5_21 = arith.constant 5 : index
    %c0_22 = arith.constant 0 : index
    %c0_23 = arith.constant 0 : index
    %79 = vector.load %arg3[%c0_20, %c5_21, %c0_22, %c0_23] : memref<1x25x16x128xbf16, #tpu.memory_space<vmem>>, vector<1x1x16x128xbf16>
    %80 = vector.shape_cast %79 : vector<1x1x16x128xbf16> to vector<16x128xbf16>
    %81 = arith.extf %80 : vector<16x128xbf16> to vector<16x128xf32>
    %82 = vector.broadcast %11 : f32 to vector<16x128xf32>
    %83 = arith.mulf %82, %81 : vector<16x128xf32>
    %84 = arith.addf %78, %83 : vector<16x128xf32>
    %c0_24 = arith.constant 0 : index
    %c6_25 = arith.constant 6 : index
    %c0_26 = arith.constant 0 : index
    %c0_27 = arith.constant 0 : index
    %85 = vector.load %arg3[%c0_24, %c6_25, %c0_26, %c0_27] : memref<1x25x16x128xbf16, #tpu.memory_space<vmem>>, vector<1x1x16x128xbf16>
    %86 = vector.shape_cast %85 : vector<1x1x16x128xbf16> to vector<16x128xbf16>
    %87 = arith.extf %86 : vector<16x128xbf16> to vector<16x128xf32>
    %88 = vector.broadcast %13 : f32 to vector<16x128xf32>
    %89 = arith.mulf %88, %87 : vector<16x128xf32>
    %90 = arith.addf %84, %89 : vector<16x128xf32>
    %c0_28 = arith.constant 0 : index
    %c7_29 = arith.constant 7 : index
    %c0_30 = arith.constant 0 : index
    %c0_31 = arith.constant 0 : index
    %91 = vector.load %arg3[%c0_28, %c7_29, %c0_30, %c0_31] : memref<1x25x16x128xbf16, #tpu.memory_space<vmem>>, vector<1x1x16x128xbf16>
    %92 = vector.shape_cast %91 : vector<1x1x16x128xbf16> to vector<16x128xbf16>
    %93 = arith.extf %92 : vector<16x128xbf16> to vector<16x128xf32>
    %94 = vector.broadcast %15 : f32 to vector<16x128xf32>
    %95 = arith.mulf %94, %93 : vector<16x128xf32>
    %96 = arith.addf %90, %95 : vector<16x128xf32>
    %c0_32 = arith.constant 0 : index
    %c8_33 = arith.constant 8 : index
    %c0_34 = arith.constant 0 : index
    %c0_35 = arith.constant 0 : index
    %97 = vector.load %arg3[%c0_32, %c8_33, %c0_34, %c0_35] : memref<1x25x16x128xbf16, #tpu.memory_space<vmem>>, vector<1x1x16x128xbf16>
    %98 = vector.shape_cast %97 : vector<1x1x16x128xbf16> to vector<16x128xbf16>
    %99 = arith.extf %98 : vector<16x128xbf16> to vector<16x128xf32>
    %100 = vector.broadcast %17 : f32 to vector<16x128xf32>
    %101 = arith.mulf %100, %99 : vector<16x128xf32>
    %102 = arith.addf %96, %101 : vector<16x128xf32>
    %c0_36 = arith.constant 0 : index
    %c9_37 = arith.constant 9 : index
    %c0_38 = arith.constant 0 : index
    %c0_39 = arith.constant 0 : index
    %103 = vector.load %arg3[%c0_36, %c9_37, %c0_38, %c0_39] : memref<1x25x16x128xbf16, #tpu.memory_space<vmem>>, vector<1x1x16x128xbf16>
    %104 = vector.shape_cast %103 : vector<1x1x16x128xbf16> to vector<16x128xbf16>
    %105 = arith.extf %104 : vector<16x128xbf16> to vector<16x128xf32>
    %106 = vector.broadcast %19 : f32 to vector<16x128xf32>
    %107 = arith.mulf %106, %105 : vector<16x128xf32>
    %108 = arith.addf %102, %107 : vector<16x128xf32>
    %c0_40 = arith.constant 0 : index
    %c10_41 = arith.constant 10 : index
    %c0_42 = arith.constant 0 : index
    %c0_43 = arith.constant 0 : index
    %109 = vector.load %arg3[%c0_40, %c10_41, %c0_42, %c0_43] : memref<1x25x16x128xbf16, #tpu.memory_space<vmem>>, vector<1x1x16x128xbf16>
    %110 = vector.shape_cast %109 : vector<1x1x16x128xbf16> to vector<16x128xbf16>
    %111 = arith.extf %110 : vector<16x128xbf16> to vector<16x128xf32>
    %112 = vector.broadcast %21 : f32 to vector<16x128xf32>
    %113 = arith.mulf %112, %111 : vector<16x128xf32>
    %114 = arith.addf %108, %113 : vector<16x128xf32>
    %c0_44 = arith.constant 0 : index
    %c11_45 = arith.constant 11 : index
    %c0_46 = arith.constant 0 : index
    %c0_47 = arith.constant 0 : index
    %115 = vector.load %arg3[%c0_44, %c11_45, %c0_46, %c0_47] : memref<1x25x16x128xbf16, #tpu.memory_space<vmem>>, vector<1x1x16x128xbf16>
    %116 = vector.shape_cast %115 : vector<1x1x16x128xbf16> to vector<16x128xbf16>
    %117 = arith.extf %116 : vector<16x128xbf16> to vector<16x128xf32>
    %118 = vector.broadcast %23 : f32 to vector<16x128xf32>
    %119 = arith.mulf %118, %117 : vector<16x128xf32>
    %120 = arith.addf %114, %119 : vector<16x128xf32>
    %c0_48 = arith.constant 0 : index
    %c12_49 = arith.constant 12 : index
    %c0_50 = arith.constant 0 : index
    %c0_51 = arith.constant 0 : index
    %121 = vector.load %arg3[%c0_48, %c12_49, %c0_50, %c0_51] : memref<1x25x16x128xbf16, #tpu.memory_space<vmem>>, vector<1x1x16x128xbf16>
    %122 = vector.shape_cast %121 : vector<1x1x16x128xbf16> to vector<16x128xbf16>
    %123 = arith.extf %122 : vector<16x128xbf16> to vector<16x128xf32>
    %124 = vector.broadcast %25 : f32 to vector<16x128xf32>
    %125 = arith.mulf %124, %123 : vector<16x128xf32>
    %126 = arith.addf %120, %125 : vector<16x128xf32>
    %c0_52 = arith.constant 0 : index
    %c13_53 = arith.constant 13 : index
    %c0_54 = arith.constant 0 : index
    %c0_55 = arith.constant 0 : index
    %127 = vector.load %arg3[%c0_52, %c13_53, %c0_54, %c0_55] : memref<1x25x16x128xbf16, #tpu.memory_space<vmem>>, vector<1x1x16x128xbf16>
    %128 = vector.shape_cast %127 : vector<1x1x16x128xbf16> to vector<16x128xbf16>
    %129 = arith.extf %128 : vector<16x128xbf16> to vector<16x128xf32>
    %130 = vector.broadcast %27 : f32 to vector<16x128xf32>
    %131 = arith.mulf %130, %129 : vector<16x128xf32>
    %132 = arith.addf %126, %131 : vector<16x128xf32>
    %c0_56 = arith.constant 0 : index
    %c14_57 = arith.constant 14 : index
    %c0_58 = arith.constant 0 : index
    %c0_59 = arith.constant 0 : index
    %133 = vector.load %arg3[%c0_56, %c14_57, %c0_58, %c0_59] : memref<1x25x16x128xbf16, #tpu.memory_space<vmem>>, vector<1x1x16x128xbf16>
    %134 = vector.shape_cast %133 : vector<1x1x16x128xbf16> to vector<16x128xbf16>
    %135 = arith.extf %134 : vector<16x128xbf16> to vector<16x128xf32>
    %136 = vector.broadcast %29 : f32 to vector<16x128xf32>
    %137 = arith.mulf %136, %135 : vector<16x128xf32>
    %138 = arith.addf %132, %137 : vector<16x128xf32>
    %c0_60 = arith.constant 0 : index
    %c15_61 = arith.constant 15 : index
    %c0_62 = arith.constant 0 : index
    %c0_63 = arith.constant 0 : index
    %139 = vector.load %arg3[%c0_60, %c15_61, %c0_62, %c0_63] : memref<1x25x16x128xbf16, #tpu.memory_space<vmem>>, vector<1x1x16x128xbf16>
    %140 = vector.shape_cast %139 : vector<1x1x16x128xbf16> to vector<16x128xbf16>
    %141 = arith.extf %140 : vector<16x128xbf16> to vector<16x128xf32>
    %142 = vector.broadcast %31 : f32 to vector<16x128xf32>
    %143 = arith.mulf %142, %141 : vector<16x128xf32>
    %144 = arith.addf %138, %143 : vector<16x128xf32>
    %c0_64 = arith.constant 0 : index
    %c16_65 = arith.constant 16 : index
    %c0_66 = arith.constant 0 : index
    %c0_67 = arith.constant 0 : index
    %145 = vector.load %arg3[%c0_64, %c16_65, %c0_66, %c0_67] : memref<1x25x16x128xbf16, #tpu.memory_space<vmem>>, vector<1x1x16x128xbf16>
    %146 = vector.shape_cast %145 : vector<1x1x16x128xbf16> to vector<16x128xbf16>
    %147 = arith.extf %146 : vector<16x128xbf16> to vector<16x128xf32>
    %148 = vector.broadcast %33 : f32 to vector<16x128xf32>
    %149 = arith.mulf %148, %147 : vector<16x128xf32>
    %150 = arith.addf %144, %149 : vector<16x128xf32>
    %c0_68 = arith.constant 0 : index
    %c17_69 = arith.constant 17 : index
    %c0_70 = arith.constant 0 : index
    %c0_71 = arith.constant 0 : index
    %151 = vector.load %arg3[%c0_68, %c17_69, %c0_70, %c0_71] : memref<1x25x16x128xbf16, #tpu.memory_space<vmem>>, vector<1x1x16x128xbf16>
    %152 = vector.shape_cast %151 : vector<1x1x16x128xbf16> to vector<16x128xbf16>
    %153 = arith.extf %152 : vector<16x128xbf16> to vector<16x128xf32>
    %154 = vector.broadcast %35 : f32 to vector<16x128xf32>
    %155 = arith.mulf %154, %153 : vector<16x128xf32>
    %156 = arith.addf %150, %155 : vector<16x128xf32>
    %c0_72 = arith.constant 0 : index
    %c18_73 = arith.constant 18 : index
    %c0_74 = arith.constant 0 : index
    %c0_75 = arith.constant 0 : index
    %157 = vector.load %arg3[%c0_72, %c18_73, %c0_74, %c0_75] : memref<1x25x16x128xbf16, #tpu.memory_space<vmem>>, vector<1x1x16x128xbf16>
    %158 = vector.shape_cast %157 : vector<1x1x16x128xbf16> to vector<16x128xbf16>
    %159 = arith.extf %158 : vector<16x128xbf16> to vector<16x128xf32>
    %160 = vector.broadcast %37 : f32 to vector<16x128xf32>
    %161 = arith.mulf %160, %159 : vector<16x128xf32>
    %162 = arith.addf %156, %161 : vector<16x128xf32>
    %c0_76 = arith.constant 0 : index
    %c19_77 = arith.constant 19 : index
    %c0_78 = arith.constant 0 : index
    %c0_79 = arith.constant 0 : index
    %163 = vector.load %arg3[%c0_76, %c19_77, %c0_78, %c0_79] : memref<1x25x16x128xbf16, #tpu.memory_space<vmem>>, vector<1x1x16x128xbf16>
    %164 = vector.shape_cast %163 : vector<1x1x16x128xbf16> to vector<16x128xbf16>
    %165 = arith.extf %164 : vector<16x128xbf16> to vector<16x128xf32>
    %166 = vector.broadcast %39 : f32 to vector<16x128xf32>
    %167 = arith.mulf %166, %165 : vector<16x128xf32>
    %168 = arith.addf %162, %167 : vector<16x128xf32>
    %c0_80 = arith.constant 0 : index
    %c20_81 = arith.constant 20 : index
    %c0_82 = arith.constant 0 : index
    %c0_83 = arith.constant 0 : index
    %169 = vector.load %arg3[%c0_80, %c20_81, %c0_82, %c0_83] : memref<1x25x16x128xbf16, #tpu.memory_space<vmem>>, vector<1x1x16x128xbf16>
    %170 = vector.shape_cast %169 : vector<1x1x16x128xbf16> to vector<16x128xbf16>
    %171 = arith.extf %170 : vector<16x128xbf16> to vector<16x128xf32>
    %172 = vector.broadcast %41 : f32 to vector<16x128xf32>
    %173 = arith.mulf %172, %171 : vector<16x128xf32>
    %174 = arith.addf %168, %173 : vector<16x128xf32>
    %c0_84 = arith.constant 0 : index
    %c21_85 = arith.constant 21 : index
    %c0_86 = arith.constant 0 : index
    %c0_87 = arith.constant 0 : index
    %175 = vector.load %arg3[%c0_84, %c21_85, %c0_86, %c0_87] : memref<1x25x16x128xbf16, #tpu.memory_space<vmem>>, vector<1x1x16x128xbf16>
    %176 = vector.shape_cast %175 : vector<1x1x16x128xbf16> to vector<16x128xbf16>
    %177 = arith.extf %176 : vector<16x128xbf16> to vector<16x128xf32>
    %178 = vector.broadcast %43 : f32 to vector<16x128xf32>
    %179 = arith.mulf %178, %177 : vector<16x128xf32>
    %180 = arith.addf %174, %179 : vector<16x128xf32>
    %c0_88 = arith.constant 0 : index
    %c22_89 = arith.constant 22 : index
    %c0_90 = arith.constant 0 : index
    %c0_91 = arith.constant 0 : index
    %181 = vector.load %arg3[%c0_88, %c22_89, %c0_90, %c0_91] : memref<1x25x16x128xbf16, #tpu.memory_space<vmem>>, vector<1x1x16x128xbf16>
    %182 = vector.shape_cast %181 : vector<1x1x16x128xbf16> to vector<16x128xbf16>
    %183 = arith.extf %182 : vector<16x128xbf16> to vector<16x128xf32>
    %184 = vector.broadcast %45 : f32 to vector<16x128xf32>
    %185 = arith.mulf %184, %183 : vector<16x128xf32>
    %186 = arith.addf %180, %185 : vector<16x128xf32>
    %c0_92 = arith.constant 0 : index
    %c23_93 = arith.constant 23 : index
    %c0_94 = arith.constant 0 : index
    %c0_95 = arith.constant 0 : index
    %187 = vector.load %arg3[%c0_92, %c23_93, %c0_94, %c0_95] : memref<1x25x16x128xbf16, #tpu.memory_space<vmem>>, vector<1x1x16x128xbf16>
    %188 = vector.shape_cast %187 : vector<1x1x16x128xbf16> to vector<16x128xbf16>
    %189 = arith.extf %188 : vector<16x128xbf16> to vector<16x128xf32>
    %190 = vector.broadcast %47 : f32 to vector<16x128xf32>
    %191 = arith.mulf %190, %189 : vector<16x128xf32>
    %192 = arith.addf %186, %191 : vector<16x128xf32>
    %c0_96 = arith.constant 0 : index
    %c24_97 = arith.constant 24 : index
    %c0_98 = arith.constant 0 : index
    %c0_99 = arith.constant 0 : index
    %193 = vector.load %arg3[%c0_96, %c24_97, %c0_98, %c0_99] : memref<1x25x16x128xbf16, #tpu.memory_space<vmem>>, vector<1x1x16x128xbf16>
    %194 = vector.shape_cast %193 : vector<1x1x16x128xbf16> to vector<16x128xbf16>
    %195 = arith.extf %194 : vector<16x128xbf16> to vector<16x128xf32>
    %196 = vector.broadcast %49 : f32 to vector<16x128xf32>
    %197 = arith.mulf %196, %195 : vector<16x128xf32>
    %198 = arith.addf %192, %197 : vector<16x128xf32>
    %c0_100 = arith.constant 0 : index
    %c0_101 = arith.constant 0 : index
    %c0_102 = arith.constant 0 : index
    %199 = vector.load %arg4[%c0_100, %c0_101, %c0_102] : memref<1x16x128xf32, #tpu.memory_space<vmem>>, vector<1x16x128xf32>
    %200 = vector.shape_cast %199 : vector<1x16x128xf32> to vector<16x128xf32>
    %201 = vector.shape_cast %198 : vector<16x128xf32> to vector<1x16x128xf32>
    tpu.vector_store %arg4[%c0_100, %c0_101, %c0_102], %201 {strides = array<i32>} : memref<1x16x128xf32, #tpu.memory_space<vmem>>, vector<1x16x128xf32>,
    return
  }
  func.func @transform_0(%arg0: i32, %arg1: i32, %arg2: memref<2x25xf32, #tpu.memory_space<smem>>) -> (i32, i32, i32, i32) {
    %c0_i32 = arith.constant 0 : i32
    %c0_i32_0 = arith.constant 0 : i32
    %c0_i32_1 = arith.constant 0 : i32
    return %arg0, %c0_i32, %arg1, %c0_i32_0 : i32, i32, i32, i32
  }
  func.func @transform_1(%arg0: i32, %arg1: i32, %arg2: memref<2x25xf32, #tpu.memory_space<smem>>) -> (i32, i32, i32) {
    %c0_i32 = arith.constant 0 : i32
    %c0_i32_0 = arith.constant 0 : i32
    return %arg0, %arg1, %c0_i32 : i32, i32, i32
  }
}

</mosaic_0001>

<llo_original>
// kernel: tpu_custom_call.1
$region0: #{tpu_custom_call.1}
  #allocation0 [shape = 'u32[]', space=smem, size = 0x4, offset = 0x4, fixed_abs, tag = 'smem constant byte address 0x4 - core index']
  #allocation1 [shape = 'u32[144,128]{1,0:T(1,128)}', space=vmem, size = 0x12000, scoped, tag = 'internal scratch']
  #allocation2 [shape = 's32[1]{0}', space=sflag, size = 0x4, scoped, tag = 'scoped memory for tpu_custom_call.1']
  #allocation3 [shape = 'u8[1024]{0}', space=smem, size = 0x400, scoped, tag = 'prefetched SMEM operand 0']
  #allocation8 [shape = 's32[]', space=sflag, size = 0x4, offset = 0, fixed_abs, tag = 'sflag constant byte address 0x0 - dummy sync flag']
  %s0 = inlined_call_operand.hbm [shape: f32[2,25], index: 0, kind: input, shape index: {}]
  %s1 = inlined_call_operand.hbm [shape: bf16[2,25,32,128], index: 1, kind: input, shape index: {}]
  %s2 = inlined_call_operand.hbm [shape: f32[2,32,128], index: 2, kind: output, shape index: {}]
  %s3 = sld [smem:[#allocation0]]
  $region41: #{tpu_custom_call.1} parent=0
    _
  %s5 = ssub.s32 1, %s3
  %s6 = scalar_select 0, %s5, %s3
  %8 = dma.hbm_to_smem %s0, 32, [#allocation3], [#allocation2]
  %9 = dma.done [#allocation2], 32
  %10 = sfence
  $region1: #{tpu_custom_call.1} parent=0
    #allocation4 [shape = 'u8[204800]{0}', space=vmem, size = 0x32000, scoped, tag = 'input window, operand 1']
    #allocation5 [shape = 's32[2]{0}', space=sflag, size = 0x8, scoped, tag = 'scoped memory for tpu_custom_call.1']
    #allocation6 [shape = 's32[2]{0}', space=sflag, size = 0x8, scoped, tag = 'scoped memory for tpu_custom_call.1']
    #allocation7 [shape = 'u8[16384]{0}', space=vmem, size = 0x4000, scoped, tag = 'output window, operand 0']
    %11 = vsyncpa [#allocation5], 0
    %s12 = scalar_lea.sflag [#allocation5], 1
    %13 = vsyncpa %s12, 0
    %14 = vsyncpa [#allocation6], 0
    %s15 = scalar_lea.sflag [#allocation6], 1
    %16 = vsyncpa %s15, 0
    loop: start=0, step=1, limit=6
    $region2: #{tpu_custom_call.1} parent=1 // loop_pre_header
      _
    $region3: #{tpu_custom_call.1} parent=1 // loop_header
      %s18 = sphi 0, %s22
      %p19 = scmp.ge.s32.totalorder %s18, 6
      %s25 = sphi 0, %s37
      %s26 = sphi 0, %s33
      %s27 = sphi 0, %s25
      %s28 = sphi 0, %s26
      %s29 = sphi 0, %s27
      %s30 = sphi 0, %s28
      %s42 = sphi 0, %s44
      %s45 = sphi 0, %s42
      %s46 = sphi 0, %s45
      %s62 = sphi 0, %s46
      %s70 = sphi 0, %s72
      %s73 = sphi 0, %s70
      %s74 = sphi 0, %s73
      %s90 = sphi 0, %s74
    $region4: #{tpu_custom_call.1} parent=1 // loop_header_branch
      %21 = sbr.rel (%p19) target = $region8
    $region5: #{tpu_custom_call.1} parent=1 // loop_body
      %s23 = ssub.s32 %s18, 1
      %s24 = ssub.s32 %s18, 2
      %s31 = sadd.s32 1, %s26
      %p32 = scmp.ge.s32.totalorder %s31, 2
      %s33 = scalar_select %p32, 0, %s31
      %s34 = sadd.s32 1, %s25
      %s35 = scalar_select %p32, %s34, %s25
      %p36 = scmp.ge.s32.totalorder %s35, 2
      %s37 = scalar_select %p36, 0, %s35
      %s38 = ssub.s32 %s25, %s37
      %s39 = ssub.s32 %s26, %s33
      %s40 = sor.u32 %s38, %s39
      %p41 = scmp.eq.s32.totalorder %s40, 0
      %s43 = sadd.s32 %s42, 1
      %s44 = scalar_select %p41, %s42, %s43
      %p47 = pneg %p41
      %p48 = scmp.eq.s32.totalorder %s18, 3
      %p49 = por %p47, %p48
      %p50 = scmp.ne.s32.totalorder %s42, %s45
      %p51 = scmp.eq.s32.totalorder %s18, 0
      %p52 = por %p50, %p51
      %p53 = scmp.ne.s32.totalorder %s42, %s45
      %p54 = scmp.eq.s32.totalorder %s23, 3
      %p55 = por %p53, %p54
      %p56 = scmp.ne.s32.totalorder %s45, %s46
      %p57 = scmp.eq.s32.totalorder %s23, 0
      %p58 = por %p56, %p57
      %p59 = scmp.ne.s32.totalorder %s45, %s46
      %p60 = scmp.eq.s32.totalorder %s24, 3
      %p61 = por %p59, %p60
      %p63 = scmp.ne.s32.totalorder %s46, %s62
      %p64 = scmp.eq.s32.totalorder %s24, 0
      %p65 = por %p63, %p64
      %s66 = ssub.s32 %s25, %s37
      %s67 = ssub.s32 %s26, %s33
      %s68 = sor.u32 %s66, %s67
      %p69 = scmp.eq.s32.totalorder %s68, 0
      %s71 = sadd.s32 %s70, 1
      %s72 = scalar_select %p69, %s70, %s71
      %p75 = pneg %p69
      %p76 = scmp.eq.s32.totalorder %s18, 3
      %p77 = por %p75, %p76
      %p78 = scmp.ne.s32.totalorder %s70, %s73
      %p79 = scmp.eq.s32.totalorder %s18, 0
      %p80 = por %p78, %p79
      %p81 = scmp.ne.s32.totalorder %s70, %s73
      %p82 = scmp.eq.s32.totalorder %s23, 3
      %p83 = por %p81, %p82
      %p84 = scmp.ne.s32.totalorder %s73, %s74
      %p85 = scmp.eq.s32.totalorder %s23, 0
      %p86 = por %p84, %p85
      %p87 = scmp.ne.s32.totalorder %s73, %s74
      %p88 = scmp.eq.s32.totalorder %s24, 3
      %p89 = por %p87, %p88
      %p91 = scmp.ne.s32.totalorder %s74, %s90
      %p92 = scmp.eq.s32.totalorder %s24, 0
      %p93 = por %p91, %p92
      %p94 = scmp.le.s32.totalorder 1, %s18
      %p95 = scmp.lt.s32.totalorder %s18, 5
      %p96 = pnand %p94, %p95
      %p97 = pneg %p96
      // Predicated region
      $region9: #{tpu_custom_call.1} parent=5 // pred_check
        _
      $region10: #{tpu_custom_call.1} parent=5 // pred_check_branch
        %99 = sbr.rel (%p96) target = $region12
      $region11: #{tpu_custom_call.1} parent=5 // pred_region
        %s100 = ssub.s32 %s18, 1
      $region12: #{tpu_custom_call.1} parent=5 // pred_fallthru
        _
      %p101 = scmp.lt.s32.totalorder %s18, 4
      // Predicated region
      $region13: #{tpu_custom_call.1} parent=5 // pred_check
        %p102 = pneg %p101
      $region14: #{tpu_custom_call.1} parent=5 // pred_check_branch
        %104 = sbr.rel (%p102) target = $region16
      $region15: #{tpu_custom_call.1} parent=5 // pred_region
        // Predicated region
        $region17: #{tpu_custom_call.1} parent=15 // pred_check
          %p105 = pneg %p52
        $region18: #{tpu_custom_call.1} parent=15 // pred_check_branch
          %107 = sbr.rel (%p105) target = $region20
        $region19: #{tpu_custom_call.1} parent=15 // pred_region
          #allocation9 [shape = 'u32[6]{0}', space=smem, size = 0x18, scoped, tag = 'DMA stride descriptor']
          %s108 = sand.u32 %s42, 1
          %s109 = scalar_lea.sflag [#allocation5], %s108
          %s110 = sand.u32 %s42, 1
          %s111 = smul.addr %s110, 200
          %s112 = scalar_lea.vmem [#allocation4], %s111
          %s113 = smul.u32 2, %s26
          %s115 = ssub.s32 3200, 3200
          %116 = vsyncadd %s109, %s115
          %s117 = smul.addr %s25, 100
          %s118 = sadd.s32 %s113, %s117
          %s119 = smul.addr %s118, 64
          %s120 = scalar_lea.hbm %s1, %s119
          %s122 = sshll.u32 1, 14
          %s123 = sxor.u32 4294967295, %s122
          %s125 = sld [smem:[#allocation0]]
          %s126 = sadd.s32 2, %s125
          %s128 = sshll.u32 7, 26
          %s129 = sxor.u32 4294967295, %s128
          %s130 = sand.u32 0, %s129
          %s131 = sshll.u32 %s126, 26
          %s132 = sor.u32 %s130, %s131
          %s133 = sshll.u32 %s112, 4
          %s134 = int_to_ptr.vmem [resolvable:$true] %s133
          %140 = sst [smem:[#allocation9]] 256
          %s141 = scalar_lea.smem [#allocation9], 1
          %142 = sst [smem:[%s141]] 128
          %s143 = scalar_lea.smem [#allocation9], 2
          %144 = sst [smem:[%s143]] 2
          %s145 = scalar_lea.smem [#allocation9], 3
          %146 = sst [smem:[%s145]] 64
          %s147 = scalar_lea.smem [#allocation9], 4
          %148 = sst [smem:[%s147]] 64
          %s149 = scalar_lea.smem [#allocation9], 5
          %150 = sst [smem:[%s149]] 4
          %152 = dma.general %s120, 3200, %s134, %s109, [#allocation8], [#allocation9], %s132, 0
        $region20: #{tpu_custom_call.1} parent=15 // pred_fallthru
          _
      $region16: #{tpu_custom_call.1} parent=5 // pred_fallthru
        _
      %p153 = scmp.le.s32.totalorder 1, %s18
      %p154 = scmp.lt.s32.totalorder %s18, 5
      %p155 = pnand %p153, %p154
      %p156 = pneg %p155
      // Predicated region
      $region21: #{tpu_custom_call.1} parent=5 // pred_check
        _
      $region22: #{tpu_custom_call.1} parent=5 // pred_check_branch
        %158 = sbr.rel (%p155) target = $region24
      $region23: #{tpu_custom_call.1} parent=5 // pred_region
        %s159 = ssub.s32 %s18, 1
        %s160 = sand.u32 %s45, 1
        %s161 = scalar_lea.sflag [#allocation5], %s160
        %s162 = sand.u32 %s45, 1
        %s163 = smul.addr %s162, 200
        %s164 = scalar_lea.vmem [#allocation4], %s163
        // Predicated region
        $region25: #{tpu_custom_call.1} parent=23 // pred_check
          %p165 = pneg %p58
        $region26: #{tpu_custom_call.1} parent=23 // pred_check_branch
          %167 = sbr.rel (%p165) target = $region28
        $region27: #{tpu_custom_call.1} parent=23 // pred_region
          %168 = dma.done %s161, 3200
        $region28: #{tpu_custom_call.1} parent=23 // pred_fallthru
          _
        %s169 = sand.u32 %s45, 1
        %s170 = scalar_lea.sflag [#allocation5], %s169
        %s171 = sand.u32 %s45, 1
        %s172 = smul.addr %s171, 200
        %s173 = scalar_lea.vmem [#allocation4], %s172
        %p174 = pneg %p58
        %p175 = pneg %p55
        %p176 = pneg %p86
        %p177 = pneg %p83
        %s178 = sand.u32 %s73, 1
        %s179 = scalar_lea.sflag [#allocation6], %s178
        %s180 = sand.u32 %s73, 1
        %s181 = smul.addr %s180, 16
        %s182 = scalar_lea.vmem [#allocation7], %s181
        %s183 = smul.u32 2, %s28
        %s184 = smul.u32 2, %s28
        %s185 = smul.u32 %s27, 128
        %s186 = sld [smem:[#allocation3 + %s185]]
        %s187 = sadd.s32 %s185, 1
        %s188 = sld [smem:[#allocation3 + %s187]]
        %s189 = sadd.s32 %s185, 2
        %s190 = sld [smem:[#allocation3 + %s189]]
        %s191 = sadd.s32 %s185, 3
        %s192 = sld [smem:[#allocation3 + %s191]]
        %s193 = sadd.s32 %s185, 4
        %s194 = sld [smem:[#allocation3 + %s193]]
        %s195 = sadd.s32 %s185, 5
        %s196 = sld [smem:[#allocation3 + %s195]]
        %s197 = sadd.s32 %s185, 6
        %s198 = sld [smem:[#allocation3 + %s197]]
        %s199 = sadd.s32 %s185, 7
        %s200 = sld [smem:[#allocation3 + %s199]]
        %s201 = sadd.s32 %s185, 8
        %s202 = sld [smem:[#allocation3 + %s201]]
        %s203 = sadd.s32 %s185, 9
        %s204 = sld [smem:[#allocation3 + %s203]]
        %s205 = sadd.s32 %s185, 10
        %s206 = sld [smem:[#allocation3 + %s205]]
        %s207 = sadd.s32 %s185, 11
        %s208 = sld [smem:[#allocation3 + %s207]]
        %s209 = sadd.s32 %s185, 12
        %s210 = sld [smem:[#allocation3 + %s209]]
        %s211 = sadd.s32 %s185, 13
        %s212 = sld [smem:[#allocation3 + %s211]]
        %s213 = sadd.s32 %s185, 14
        %s214 = sld [smem:[#allocation3 + %s213]]
        %s215 = sadd.s32 %s185, 15
        %s216 = sld [smem:[#allocation3 + %s215]]
        %s217 = sadd.s32 %s185, 16
        %s218 = sld [smem:[#allocation3 + %s217]]
        %s219 = sadd.s32 %s185, 17
        %s220 = sld [smem:[#allocation3 + %s219]]
        %s221 = sadd.s32 %s185, 18
        %s222 = sld [smem:[#allocation3 + %s221]]
        %s223 = sadd.s32 %s185, 19
        %s224 = sld [smem:[#allocation3 + %s223]]
        %s225 = sadd.s32 %s185, 20
        %s226 = sld [smem:[#allocation3 + %s225]]
        %s227 = sadd.s32 %s185, 21
        %s228 = sld [smem:[#allocation3 + %s227]]
        %s229 = sadd.s32 %s185, 22
        %s230 = sld [smem:[#allocation3 + %s229]]
        %s231 = sadd.s32 %s185, 23
        %s232 = sld [smem:[#allocation3 + %s231]]
        %s233 = sadd.s32 %s185, 24
        %s234 = sld [smem:[#allocation3 + %s233]]
        %v235 = vld [vmem:[%s164] sm:$0xf]
        %v236 = vld [vmem:[%s164 + $0x4] sm:$0xf]
        %v237 = vunpack.c.l.bf16 %v235
        %v238 = vunpack.c.l.bf16 %v236
        %v239 = vstv %s186
        %v240 = vmul.f32 %v239, %v237
        %v241 = vmul.f32 %v239, %v238
        %s242 = scalar_lea.vmem %s164, 8 [#allocation4]
        %v243 = vld [vmem:[%s242] sm:$0xf]
        %v244 = vld [vmem:[%s242 + $0x4] sm:$0xf]
        %v245 = vunpack.c.l.bf16 %v243
        %v246 = vunpack.c.l.bf16 %v244
        %v247 = vstv %s188
        %v248 = vmul.f32 %v247, %v245
        %v249 = vmul.f32 %v247, %v246
        %v250 = vadd.f32 %v240, %v248
        %v251 = vadd.f32 %v241, %v249
        %s252 = scalar_lea.vmem %s164, 16 [#allocation4]
        %v253 = vld [vmem:[%s252] sm:$0xf]
        %v254 = vld [vmem:[%s252 + $0x4] sm:$0xf]
        %v255 = vunpack.c.l.bf16 %v253
        %v256 = vunpack.c.l.bf16 %v254
        %v257 = vstv %s190
        %v258 = vmul.f32 %v257, %v255
        %v259 = vmul.f32 %v257, %v256
        %v260 = vadd.f32 %v250, %v258
        %v261 = vadd.f32 %v251, %v259
        %s262 = scalar_lea.vmem %s164, 24 [#allocation4]
        %v263 = vld [vmem:[%s262] sm:$0xf]
        %v264 = vld [vmem:[%s262 + $0x4] sm:$0xf]
        %v265 = vunpack.c.l.bf16 %v263
        %v266 = vunpack.c.l.bf16 %v264
        %v267 = vstv %s192
        %v268 = vmul.f32 %v267, %v265
        %v269 = vmul.f32 %v267, %v266
        %v270 = vadd.f32 %v260, %v268
        %v271 = vadd.f32 %v261, %v269
        %s272 = scalar_lea.vmem %s164, 32 [#allocation4]
        %v273 = vld [vmem:[%s272] sm:$0xf]
        %v274 = vld [vmem:[%s272 + $0x4] sm:$0xf]
        %v275 = vunpack.c.l.bf16 %v273
        %v276 = vunpack.c.l.bf16 %v274
        %v277 = vstv %s194
        %v278 = vmul.f32 %v277, %v275
        %v279 = vmul.f32 %v277, %v276
        %v280 = vadd.f32 %v270, %v278
        %v281 = vadd.f32 %v271, %v279
        %s282 = scalar_lea.vmem %s164, 40 [#allocation4]
        %v283 = vld [vmem:[%s282] sm:$0xf]
        %v284 = vld [vmem:[%s282 + $0x4] sm:$0xf]
        %v285 = vunpack.c.l.bf16 %v283
        %v286 = vunpack.c.l.bf16 %v284
        %v287 = vstv %s196
        %v288 = vmul.f32 %v287, %v285
        %v289 = vmul.f32 %v287, %v286
        %v290 = vadd.f32 %v280, %v288
        %v291 = vadd.f32 %v281, %v289
        %s292 = scalar_lea.vmem %s164, 48 [#allocation4]
        %v293 = vld [vmem:[%s292] sm:$0xf]
        %v294 = vld [vmem:[%s292 + $0x4] sm:$0xf]
        %v295 = vunpack.c.l.bf16 %v293
        %v296 = vunpack.c.l.bf16 %v294
        %v297 = vstv %s198
        %v298 = vmul.f32 %v297, %v295
        %v299 = vmul.f32 %v297, %v296
        %v300 = vadd.f32 %v290, %v298
        %v301 = vadd.f32 %v291, %v299
        %s302 = scalar_lea.vmem %s164, 56 [#allocation4]
        %v303 = vld [vmem:[%s302] sm:$0xf]
        %v304 = vld [vmem:[%s302 + $0x4] sm:$0xf]
        %v305 = vunpack.c.l.bf16 %v303
        %v306 = vunpack.c.l.bf16 %v304
        %v307 = vstv %s200
        %v308 = vmul.f32 %v307, %v305
        %v309 = vmul.f32 %v307, %v306
        %v310 = vadd.f32 %v300, %v308
        %v311 = vadd.f32 %v301, %v309
        %s312 = scalar_lea.vmem %s164, 64 [#allocation4]
        %v313 = vld [vmem:[%s312] sm:$0xf]
        %v314 = vld [vmem:[%s312 + $0x4] sm:$0xf]
        %v315 = vunpack.c.l.bf16 %v313
        %v316 = vunpack.c.l.bf16 %v314
        %v317 = vstv %s202
        %v318 = vmul.f32 %v317, %v315
        %v319 = vmul.f32 %v317, %v316
        %v320 = vadd.f32 %v310, %v318
        %v321 = vadd.f32 %v311, %v319
        %s322 = scalar_lea.vmem %s164, 72 [#allocation4]
        %v323 = vld [vmem:[%s322] sm:$0xf]
        %v324 = vld [vmem:[%s322 + $0x4] sm:$0xf]
        %v325 = vunpack.c.l.bf16 %v323
        %v326 = vunpack.c.l.bf16 %v324
        %v327 = vstv %s204
        %v328 = vmul.f32 %v327, %v325
        %v329 = vmul.f32 %v327, %v326
        %v330 = vadd.f32 %v320, %v328
        %v331 = vadd.f32 %v321, %v329
        %s332 = scalar_lea.vmem %s164, 80 [#allocation4]
        %v333 = vld [vmem:[%s332] sm:$0xf]
        %v334 = vld [vmem:[%s332 + $0x4] sm:$0xf]
        %v335 = vunpack.c.l.bf16 %v333
        %v336 = vunpack.c.l.bf16 %v334
        %v337 = vstv %s206
        %v338 = vmul.f32 %v337, %v335
        %v339 = vmul.f32 %v337, %v336
        %v340 = vadd.f32 %v330, %v338
        %v341 = vadd.f32 %v331, %v339
        %s342 = scalar_lea.vmem %s164, 88 [#allocation4]
        %v343 = vld [vmem:[%s342] sm:$0xf]
        %v344 = vld [vmem:[%s342 + $0x4] sm:$0xf]
        %v345 = vunpack.c.l.bf16 %v343
        %v346 = vunpack.c.l.bf16 %v344
        %v347 = vstv %s208
        %v348 = vmul.f32 %v347, %v345
        %v349 = vmul.f32 %v347, %v346
        %v350 = vadd.f32 %v340, %v348
        %v351 = vadd.f32 %v341, %v349
        %s352 = scalar_lea.vmem %s164, 96 [#allocation4]
        %v353 = vld [vmem:[%s352] sm:$0xf]
        %v354 = vld [vmem:[%s352 + $0x4] sm:$0xf]
        %v355 = vunpack.c.l.bf16 %v353
        %v356 = vunpack.c.l.bf16 %v354
        %v357 = vstv %s210
        %v358 = vmul.f32 %v357, %v355
        %v359 = vmul.f32 %v357, %v356
        %v360 = vadd.f32 %v350, %v358
        %v361 = vadd.f32 %v351, %v359
        %s362 = scalar_lea.vmem %s164, 104 [#allocation4]
        %v363 = vld [vmem:[%s362] sm:$0xf]
        %v364 = vld [vmem:[%s362 + $0x4] sm:$0xf]
        %v365 = vunpack.c.l.bf16 %v363
        %v366 = vunpack.c.l.bf16 %v364
        %v367 = vstv %s212
        %v368 = vmul.f32 %v367, %v365
        %v369 = vmul.f32 %v367, %v366
        %v370 = vadd.f32 %v360, %v368
        %v371 = vadd.f32 %v361, %v369
        %s372 = scalar_lea.vmem %s164, 112 [#allocation4]
        %v373 = vld [vmem:[%s372] sm:$0xf]
        %v374 = vld [vmem:[%s372 + $0x4] sm:$0xf]
        %v375 = vunpack.c.l.bf16 %v373
        %v376 = vunpack.c.l.bf16 %v374
        %v377 = vstv %s214
        %v378 = vmul.f32 %v377, %v375
        %v379 = vmul.f32 %v377, %v376
        %v380 = vadd.f32 %v370, %v378
        %v381 = vadd.f32 %v371, %v379
        %s382 = scalar_lea.vmem %s164, 120 [#allocation4]
        %v383 = vld [vmem:[%s382] sm:$0xf]
        %v384 = vld [vmem:[%s382 + $0x4] sm:$0xf]
        %v385 = vunpack.c.l.bf16 %v383
        %v386 = vunpack.c.l.bf16 %v384
        %v387 = vstv %s216
        %v388 = vmul.f32 %v387, %v385
        %v389 = vmul.f32 %v387, %v386
        %v390 = vadd.f32 %v380, %v388
        %v391 = vadd.f32 %v381, %v389
        %s392 = scalar_lea.vmem %s164, 128 [#allocation4]
        %v393 = vld [vmem:[%s392] sm:$0xf]
        %v394 = vld [vmem:[%s392 + $0x4] sm:$0xf]
        %v395 = vunpack.c.l.bf16 %v393
        %v396 = vunpack.c.l.bf16 %v394
        %v397 = vstv %s218
        %v398 = vmul.f32 %v397, %v395
        %v399 = vmul.f32 %v397, %v396
        %v400 = vadd.f32 %v390, %v398
        %v401 = vadd.f32 %v391, %v399
        %s402 = scalar_lea.vmem %s164, 136 [#allocation4]
        %v403 = vld [vmem:[%s402] sm:$0xf]
        %v404 = vld [vmem:[%s402 + $0x4] sm:$0xf]
        %v405 = vunpack.c.l.bf16 %v403
        %v406 = vunpack.c.l.bf16 %v404
        %v407 = vstv %s220
        %v408 = vmul.f32 %v407, %v405
        %v409 = vmul.f32 %v407, %v406
        %v410 = vadd.f32 %v400, %v408
        %v411 = vadd.f32 %v401, %v409
        %s412 = scalar_lea.vmem %s164, 144 [#allocation4]
        %v413 = vld [vmem:[%s412] sm:$0xf]
        %v414 = vld [vmem:[%s412 + $0x4] sm:$0xf]
        %v415 = vunpack.c.l.bf16 %v413
        %v416 = vunpack.c.l.bf16 %v414
        %v417 = vstv %s222
        %v418 = vmul.f32 %v417, %v415
        %v419 = vmul.f32 %v417, %v416
        %v420 = vadd.f32 %v410, %v418
        %v421 = vadd.f32 %v411, %v419
        %s422 = scalar_lea.vmem %s164, 152 [#allocation4]
        %v423 = vld [vmem:[%s422] sm:$0xf]
        %v424 = vld [vmem:[%s422 + $0x4] sm:$0xf]
        %v425 = vunpack.c.l.bf16 %v423
        %v426 = vunpack.c.l.bf16 %v424
        %v427 = vstv %s224
        %v428 = vmul.f32 %v427, %v425
        %v429 = vmul.f32 %v427, %v426
        %v430 = vadd.f32 %v420, %v428
        %v431 = vadd.f32 %v421, %v429
        %s432 = scalar_lea.vmem %s164, 160 [#allocation4]
        %v433 = vld [vmem:[%s432] sm:$0xf]
        %v434 = vld [vmem:[%s432 + $0x4] sm:$0xf]
        %v435 = vunpack.c.l.bf16 %v433
        %v436 = vunpack.c.l.bf16 %v434
        %v437 = vstv %s226
        %v438 = vmul.f32 %v437, %v435
        %v439 = vmul.f32 %v437, %v436
        %v440 = vadd.f32 %v430, %v438
        %v441 = vadd.f32 %v431, %v439
        %s442 = scalar_lea.vmem %s164, 168 [#allocation4]
        %v443 = vld [vmem:[%s442] sm:$0xf]
        %v444 = vld [vmem:[%s442 + $0x4] sm:$0xf]
        %v445 = vunpack.c.l.bf16 %v443
        %v446 = vunpack.c.l.bf16 %v444
        %v447 = vstv %s228
        %v448 = vmul.f32 %v447, %v445
        %v449 = vmul.f32 %v447, %v446
        %v450 = vadd.f32 %v440, %v448
        %v451 = vadd.f32 %v441, %v449
        %s452 = scalar_lea.vmem %s164, 176 [#allocation4]
        %v453 = vld [vmem:[%s452] sm:$0xf]
        %v454 = vld [vmem:[%s452 + $0x4] sm:$0xf]
        %v455 = vunpack.c.l.bf16 %v453
        %v456 = vunpack.c.l.bf16 %v454
        %v457 = vstv %s230
        %v458 = vmul.f32 %v457, %v455
        %v459 = vmul.f32 %v457, %v456
        %v460 = vadd.f32 %v450, %v458
        %v461 = vadd.f32 %v451, %v459
        %s462 = scalar_lea.vmem %s164, 184 [#allocation4]
        %v463 = vld [vmem:[%s462] sm:$0xf]
        %v464 = vld [vmem:[%s462 + $0x4] sm:$0xf]
        %v465 = vunpack.c.l.bf16 %v463
        %v466 = vunpack.c.l.bf16 %v464
        %v467 = vstv %s232
        %v468 = vmul.f32 %v467, %v465
        %v469 = vmul.f32 %v467, %v466
        %v470 = vadd.f32 %v460, %v468
        %v471 = vadd.f32 %v461, %v469
        %s472 = scalar_lea.vmem %s164, 192 [#allocation4]
        %v473 = vld [vmem:[%s472] sm:$0xf]
        %v474 = vld [vmem:[%s472 + $0x4] sm:$0xf]
        %v475 = vunpack.c.l.bf16 %v473
        %v476 = vunpack.c.l.bf16 %v474
        %v477 = vstv %s234
        %v478 = vmul.f32 %v477, %v475
        %v479 = vmul.f32 %v477, %v476
        %v480 = vadd.f32 %v470, %v478
        %v481 = vadd.f32 %v471, %v479
        %482 = vst [vmem:[%s182] sm:$0xff] %v480
        %483 = vst [vmem:[%s182 + $0x8] sm:$0xff] %v481
        %s484 = sand.u32 %s73, 1
        %s485 = scalar_lea.sflag [#allocation6], %s484
        %s486 = sand.u32 %s73, 1
        %s487 = smul.addr %s486, 16
        %s488 = scalar_lea.vmem [#allocation7], %s487
        // Predicated region
        $region29: #{tpu_custom_call.1} parent=23 // pred_check
          %p489 = pneg %p83
        $region30: #{tpu_custom_call.1} parent=23 // pred_check_branch
          %491 = sbr.rel (%p489) target = $region32
        $region31: #{tpu_custom_call.1} parent=23 // pred_region
          %s492 = smul.u32 2, %s28
          %s494 = ssub.s32 256, 256
          %495 = vsyncadd %s485, %s494
          %s496 = smul.addr %s27, 4
          %s497 = sadd.s32 %s492, %s496
          %s498 = smul.addr %s497, 128
          %s499 = scalar_lea.hbm %s2, %s498
          %s500 = sshll.u32 %s488, 4
          %s501 = int_to_ptr.vmem [resolvable:$true] %s500
          %506 = dma.vmem_to_hbm [thread:$0]  %s501, 256, %s499, %s485, 128, 128, 8
        $region32: #{tpu_custom_call.1} parent=23 // pred_fallthru
          _
      $region24: #{tpu_custom_call.1} parent=5 // pred_fallthru
        _
      %p507 = scmp.le.s32.totalorder 2, %s18
      // Predicated region
      $region33: #{tpu_custom_call.1} parent=5 // pred_check
        %p508 = pneg %p507
      $region34: #{tpu_custom_call.1} parent=5 // pred_check_branch
        %510 = sbr.rel (%p508) target = $region36
      $region35: #{tpu_custom_call.1} parent=5 // pred_region
        %s511 = ssub.s32 %s18, 2
        // Predicated region
        $region37: #{tpu_custom_call.1} parent=35 // pred_check
          %p512 = pneg %p89
        $region38: #{tpu_custom_call.1} parent=35 // pred_check_branch
          %514 = sbr.rel (%p512) target = $region40
        $region39: #{tpu_custom_call.1} parent=35 // pred_region
          %s515 = sand.u32 %s74, 1
          %s516 = scalar_lea.sflag [#allocation6], %s515
          %s517 = sand.u32 %s74, 1
          %s518 = smul.addr %s517, 16
          %s519 = scalar_lea.vmem [#allocation7], %s518
          %520 = dma.done %s516, 256
        $region40: #{tpu_custom_call.1} parent=35 // pred_fallthru
          _
      $region36: #{tpu_custom_call.1} parent=5 // pred_fallthru
        _
    $region6: #{tpu_custom_call.1} parent=1 // loop_footer
      %s22 = sadd.s32 1, %s18
    $region7: #{tpu_custom_call.1} parent=1 // loop_footer_branch
      %17 = sbr.rel target = $region3
    $region8: #{tpu_custom_call.1} parent=1 // loop_exit
      _
    %521 = vsyncpa [#allocation5], 1
    %s522 = scalar_lea.sflag [#allocation5], 1
    %523 = vsyncpa %s522, 1
    %524 = vsyncpa [#allocation6], 1
    %s525 = scalar_lea.sflag [#allocation6], 1
    %526 = vsyncpa %s525, 1

</llo_original>
